<compile_context>
chip_gen: v7x
topology: tpu7x:2x2x1
jax: 0.10.0
libtpu: 0.0.40
codegen_flags: <defaults>
</compile_context>

<pallas_src>
import functools

import jax
import jax.numpy as jnp
from jax import lax
from jax.experimental import pallas as pl
from jax.experimental.pallas import tpu as pltpu


def _mlp_kernel(x_ref, w1_ref, b1_ref, w2_ref, b2_ref, o_ref):
    # x_ref : (TB, F)   batch tile, natural layout (no wrapper transpose of x)
    # w1_ref: (H, F)    PyTorch layout (out, in)
    # b1_ref: (H, 1)
    # w2_ref: (O, H)
    # b2_ref: (O, 1)
    # o_ref : (O, TB)   transposed, lane-dense output tile
    #
    # Layer 0: h^T = W1 . x^T   (contract the feature axis of both operands).
    # Mosaic may relayout the (TB, F) x tile to feed the MXU RHS; at these
    # shapes it is hidden under the input DMA (verified acceptable; see review).
    h_t = lax.dot_general(
        w1_ref[...], x_ref[...],
        dimension_numbers=(((1,), (1,)), ((), ())),
        preferred_element_type=jnp.float32,
    )                                                   # (H, TB)
    h_t = jnp.maximum(h_t + b1_ref[...], 0.0)           # bias + nn.ReLU
    # (nn.Dropout in eval mode == identity; interdrops are None)
    # Layer 1: o^T = W2 . h^T, no activator.
    o_t = jnp.dot(w2_ref[...], h_t, preferred_element_type=jnp.float32)  # (O, TB)
    o_ref[...] = o_t + b2_ref[...]


def _round_up(n, m):
    return ((n + m - 1) // m) * m


def _cdiv(a, b):
    return (a + b - 1) // b


@functools.partial(
    jax.jit, static_argnames=("target_tile_rows", "min_tiles", "transposed_output")
)
def numeric_only_gene_forward(
    x, w1, b1, w2, b2, *, target_tile_rows=16384, min_tiles=2, transposed_output=False
):
    """x: (B, F) f32; weights in PyTorch nn.Linear layout:
       w1: (H, F), b1: (H,), w2: (O, H), b2: (O,).

    Returns (B, O) f32, or (O, B) if transposed_output=True (saves a full
    extra HBM pass for consumers that can contract against that layout)."""
    B, F = x.shape
    H = w1.shape[0]
    O = w2.shape[0]

    # ---- Adaptive batch tile selection -------------------------------------
    # Big enough to amortize the ~0.35 us per-grid-step overhead at HBM
    # roofline, >= min_tiles tiles so both v7x TensorCores get work, and sized
    # from B (not a fixed power of two) so padding waste stays < 128 rows/tile.
    b128 = _round_up(max(B, 1), 128)
    n_tiles = max(min_tiles, _cdiv(b128, target_tile_rows))
    tb = max(128, _round_up(_cdiv(b128, n_tiles), 128))
    b_pad = _round_up(max(B, 1), tb)
    if b_pad != B:
        x = jnp.pad(x, ((0, b_pad - B), (0, 0)))
    grid = b_pad // tb

    # ---- Explicit VMEM budget -----------------------------------------------
    # The (tb, F) f32 x tile is lane-padded to 128 lanes in VMEM (8x nominal
    # for F=16); inputs and outputs are double-buffered; the kernel also
    # materializes an x^T feed and the (H, tb) hidden intermediate.
    lane = 128
    bytes_f32 = 4
    x_tile_bytes = tb * lane * bytes_f32                       # lane-padded x tile
    out_tile_bytes = _round_up(O, 8) * tb * bytes_f32          # (O, tb) tile
    h_tmp_bytes = _round_up(H, 8) * tb * bytes_f32             # (H, tb) intermediate
    xT_tmp_bytes = _round_up(F, 8) * tb * bytes_f32            # possible relayout temp
    weights_bytes = (H + H + O + O) * lane * bytes_f32         # lane-padded params
    vmem_limit = (
        2 * x_tile_bytes          # double-buffered input
        + 2 * out_tile_bytes      # double-buffered output
        + h_tmp_bytes
        + xT_tmp_bytes
        + weights_bytes
        + (4 << 20)               # compiler scratch / slack
    )
    vmem_limit = int(min(max(vmem_limit, 16 << 20), 100 << 20))

    b1_col = b1.reshape(H, 1).astype(jnp.float32)
    b2_col = b2.reshape(O, 1).astype(jnp.float32)

    out_t = pl.pallas_call(
        _mlp_kernel,
        out_shape=jax.ShapeDtypeStruct((O, b_pad), jnp.float32),
        grid_spec=pltpu.PrefetchScalarGridSpec(
            num_scalar_prefetch=0,
            grid=(grid,),
            in_specs=[
                pl.BlockSpec((tb, F), lambda i: (i, 0)),   # x tile (pipelined)
                pl.BlockSpec((H, F), lambda i: (0, 0)),    # w1 (VMEM-resident)
                pl.BlockSpec((H, 1), lambda i: (0, 0)),    # b1
                pl.BlockSpec((O, H), lambda i: (0, 0)),    # w2
                pl.BlockSpec((O, 1), lambda i: (0, 0)),    # b2
            ],
            out_specs=pl.BlockSpec((O, tb), lambda i: (0, i)),
        ),
        compiler_params=pltpu.CompilerParams(
            dimension_semantics=("parallel",),
            vmem_limit_bytes=vmem_limit,
        ),
    )(x, w1, b1_col, w2, b2_col)

    out_t = out_t[:, :B]
    if transposed_output:
        return out_t                 # (O, B): no extra HBM transpose pass
    # Drop-in PyTorch orientation; XLA fuses the slice+transpose into the
    # consumer where possible (extra pass over ~32 B/row only if it can't).
    return out_t.T


if __name__ == "__main__":
    # Small shapes consistent with the module: batch=8, numerical_shape=16,
    # layers_dimensions=[32, 8].
    B, F, H, O = 8, 16, 32, 8

    key = jax.random.PRNGKey(0)
    kx, k1, k2, k3, k4 = jax.random.split(key, 5)

    x = jax.random.normal(kx, (B, F), dtype=jnp.float32)

    # Deterministic parameters in PyTorch nn.Linear layout: weight (out, in).
    w1 = jax.random.normal(k1, (H, F), dtype=jnp.float32) * 0.1
    b1 = jax.random.normal(k2, (H,), dtype=jnp.float32) * 0.1
    w2 = jax.random.normal(k3, (O, H), dtype=jnp.float32) * 0.1
    b2 = jax.random.normal(k4, (O,), dtype=jnp.float32) * 0.1

    out = numeric_only_gene_forward(x, w1, b1, w2, b2)
    out = jax.block_until_ready(out)

    # Pure-JAX reference of the same forward (torch.cat([x],1) is identity).
    ref = jnp.maximum(x @ w1.T + b1, 0.0) @ w2.T + b2
    assert out.shape == (B, O)
    assert jnp.allclose(out, ref, atol=1e-5, rtol=1e-5)

    # Transposed-output path (avoids the wrapper transpose for fused consumers).
    out_t = jax.block_until_ready(
        numeric_only_gene_forward(x, w1, b1, w2, b2, transposed_output=True)
    )
    assert out_t.shape == (O, B)
    assert jnp.allclose(out_t.T, ref, atol=1e-5, rtol=1e-5)

    # TODO(synk): RNN-layer branch of forward (hidden_cells path) not
    # instantiated here; the NumericOnly config uses only Linear layers.
    print("KERNEL_OK")
</pallas_src>

<mosaic_0001>
module attributes {stable_mosaic.version = 11 : i64} {
  func.func @_mlp_kernel(%arg0: i32, %arg1: memref<128x16xf32, #tpu.memory_space<vmem>>, %arg2: memref<32x16xf32, #tpu.memory_space<vmem>>, %arg3: memref<32x1xf32, #tpu.memory_space<vmem>>, %arg4: memref<8x32xf32, #tpu.memory_space<vmem>>, %arg5: memref<8x1xf32, #tpu.memory_space<vmem>>, %arg6: memref<8x128xf32, #tpu.memory_space<vmem>>) attributes {dimension_semantics = [#tpu.dimension_semantics<parallel>], iteration_bounds = array<i64: 1>, scalar_prefetch = 0 : i64, scratch_operands = 0 : i64, tpu.core_type = #tpu.core_type<tc>, window_params = [{transform_indices = @transform_0, window_bounds = array<i64: 128, 16>}, {pipeline_mode = #tpu.pipeline_mode<synchronous>, transform_indices = @transform_1, window_bounds = array<i64: 32, 16>}, {pipeline_mode = #tpu.pipeline_mode<synchronous>, transform_indices = @transform_2, window_bounds = array<i64: 32, 1>}, {pipeline_mode = #tpu.pipeline_mode<synchronous>, transform_indices = @transform_3, window_bounds = array<i64: 8, 32>}, {pipeline_mode = #tpu.pipeline_mode<synchronous>, transform_indices = @transform_4, window_bounds = array<i64: 8, 1>}, {transform_indices = @transform_5, window_bounds = array<i64: 8, 128>}]} {
    %c0 = arith.constant 0 : index
    %c0_0 = arith.constant 0 : index
    %0 = vector.load %arg2[%c0, %c0_0] : memref<32x16xf32, #tpu.memory_space<vmem>>, vector<32x16xf32>
    %c0_1 = arith.constant 0 : index
    %c0_2 = arith.constant 0 : index
    %1 = vector.load %arg1[%c0_1, %c0_2] : memref<128x16xf32, #tpu.memory_space<vmem>>, vector<128x16xf32>
    %cst = arith.constant dense<0.000000e+00> : vector<32x128xf32>
    %2 = tpu.matmul %0, %1, %cst {dimension_numbers = #tpu.dot_dimension_numbers<[1], [1], [0], [0], [0, 0, 1, 0], [], []>} : vector<32x16xf32>, vector<128x16xf32>, vector<32x128xf32> -> vector<32x128xf32>
    %c0_3 = arith.constant 0 : index
    %c0_4 = arith.constant 0 : index
    %3 = vector.load %arg3[%c0_3, %c0_4] : memref<32x1xf32, #tpu.memory_space<vmem>>, vector<32x1xf32>
    %4 = vector.broadcast %3 : vector<32x1xf32> to vector<32x128xf32>
    %5 = arith.addf %2, %4 : vector<32x128xf32>
    %cst_5 = arith.constant 0.000000e+00 : f32
    %6 = vector.broadcast %cst_5 : f32 to vector<32x128xf32>
    %7 = arith.maximumf %5, %6 : vector<32x128xf32>
    %c0_6 = arith.constant 0 : index
    %c0_7 = arith.constant 0 : index
    %8 = vector.load %arg4[%c0_6, %c0_7] : memref<8x32xf32, #tpu.memory_space<vmem>>, vector<8x32xf32>
    %cst_8 = arith.constant dense<0.000000e+00> : vector<8x128xf32>
    %9 = tpu.matmul %8, %7, %cst_8 {dimension_numbers = #tpu.dot_dimension_numbers<[1], [0], [0], [1], [0, 0, 1, 1], [], []>} : vector<8x32xf32>, vector<32x128xf32>, vector<8x128xf32> -> vector<8x128xf32>
    %c0_9 = arith.constant 0 : index
    %c0_10 = arith.constant 0 : index
    %10 = vector.load %arg5[%c0_9, %c0_10] : memref<8x1xf32, #tpu.memory_space<vmem>>, vector<8x1xf32>
    %11 = vector.broadcast %10 : vector<8x1xf32> to vector<8x128xf32>
    %12 = arith.addf %9, %11 : vector<8x128xf32>
    %c0_11 = arith.constant 0 : index
    %c0_12 = arith.constant 0 : index
    %13 = vector.load %arg6[%c0_11, %c0_12] : memref<8x128xf32, #tpu.memory_space<vmem>>, vector<8x128xf32>
    tpu.vector_store %arg6[%c0_11, %c0_12], %12 {strides = array<i32>} : memref<8x128xf32, #tpu.memory_space<vmem>>, vector<8x128xf32>,
    return
  }
  func.func @transform_0(%arg0: i32) -> (i32, i32) {
    %c0_i32 = arith.constant 0 : i32
    %c0_i32_0 = arith.constant 0 : i32
    return %arg0, %c0_i32 : i32, i32
  }
  func.func @transform_1(%arg0: i32) -> (i32, i32) {
    %c0_i32 = arith.constant 0 : i32
    %c0_i32_0 = arith.constant 0 : i32
    %c0_i32_1 = arith.constant 0 : i32
    return %c0_i32, %c0_i32_0 : i32, i32
  }
  func.func @transform_2(%arg0: i32) -> (i32, i32) {
    %c0_i32 = arith.constant 0 : i32
    %c0_i32_0 = arith.constant 0 : i32
    %c0_i32_1 = arith.constant 0 : i32
    return %c0_i32, %c0_i32_0 : i32, i32
  }
  func.func @transform_3(%arg0: i32) -> (i32, i32) {
    %c0_i32 = arith.constant 0 : i32
    %c0_i32_0 = arith.constant 0 : i32
    %c0_i32_1 = arith.constant 0 : i32
    return %c0_i32, %c0_i32_0 : i32, i32
  }
  func.func @transform_4(%arg0: i32) -> (i32, i32) {
    %c0_i32 = arith.constant 0 : i32
    %c0_i32_0 = arith.constant 0 : i32
    %c0_i32_1 = arith.constant 0 : i32
    return %c0_i32, %c0_i32_0 : i32, i32
  }
  func.func @transform_5(%arg0: i32) -> (i32, i32) {
    %c0_i32 = arith.constant 0 : i32
    %c0_i32_0 = arith.constant 0 : i32
    return %c0_i32, %arg0 : i32, i32
  }
}

</mosaic_0001>

<llo_original>
// kernel: numeric_only_gene_forward.1
$region0: #{numeric_only_gene_forward.1}
  #allocation0 [shape = 'u32[]', space=smem, size = 0x4, offset = 0x4, fixed_abs, tag = 'smem constant byte address 0x4 - core index']
  #allocation1 [shape = 'u32[144,128]{1,0:T(1,128)}', space=vmem, size = 0x12000, scoped, tag = 'internal scratch']
  %s0 = inlined_call_operand.vmem [shape: f32[128,16], index: 0, kind: input, shape index: {}]
  %s1 = inlined_call_operand.vmem [shape: f32[32,16], index: 1, kind: input, shape index: {}]
  %s2 = inlined_call_operand.vmem [shape: f32[32,1], index: 2, kind: input, shape index: {}]
  %s3 = inlined_call_operand.vmem [shape: f32[8,32], index: 3, kind: input, shape index: {}]
  %s4 = inlined_call_operand.vmem [shape: f32[8,1], index: 4, kind: input, shape index: {}]
  %s5 = inlined_call_operand.vmem [shape: f32[8,128], index: 5, kind: output, shape index: {}]
  %s6 = sld [smem:[#allocation0]]
  $region30: #{numeric_only_gene_forward.1} parent=0
    _
  %s8 = ssub.s32 1, %s6
  %s9 = scalar_select 0, %s8, %s6
  // Predicated region
  $region2: #{numeric_only_gene_forward.1} parent=0 // pred_check
    _
  $region3: #{numeric_only_gene_forward.1} parent=0 // pred_check_branch
    %11 = sbr.rel (0) target = $region5
  $region4: #{numeric_only_gene_forward.1} parent=0 // pred_region
    _
  $region5: #{numeric_only_gene_forward.1} parent=0 // pred_fallthru
    _
  // Predicated region
  $region6: #{numeric_only_gene_forward.1} parent=0 // pred_check
    _
  $region7: #{numeric_only_gene_forward.1} parent=0 // pred_check_branch
    %13 = sbr.rel (0) target = $region9
  $region8: #{numeric_only_gene_forward.1} parent=0 // pred_region
    _
  $region9: #{numeric_only_gene_forward.1} parent=0 // pred_fallthru
    _
  // Predicated region
  $region10: #{numeric_only_gene_forward.1} parent=0 // pred_check
    _
  $region11: #{numeric_only_gene_forward.1} parent=0 // pred_check_branch
    %15 = sbr.rel (0) target = $region13
  $region12: #{numeric_only_gene_forward.1} parent=0 // pred_region
    _
  $region13: #{numeric_only_gene_forward.1} parent=0 // pred_fallthru
    _
  // Predicated region
  $region14: #{numeric_only_gene_forward.1} parent=0 // pred_check
    _
  $region15: #{numeric_only_gene_forward.1} parent=0 // pred_check_branch
    %17 = sbr.rel (0) target = $region17
  $region16: #{numeric_only_gene_forward.1} parent=0 // pred_region
    _
  $region17: #{numeric_only_gene_forward.1} parent=0 // pred_fallthru
    _
  // Predicated region
  $region18: #{numeric_only_gene_forward.1} parent=0 // pred_check
    _
  $region19: #{numeric_only_gene_forward.1} parent=0 // pred_check_branch
    %19 = sbr.rel (0) target = $region21
  $region20: #{numeric_only_gene_forward.1} parent=0 // pred_region
    _
  $region21: #{numeric_only_gene_forward.1} parent=0 // pred_fallthru
    _
  %v20 = vld [vmem:[%s1] sm:$0xff]
  %v21 = vld [vmem:[%s1 + $0x8] sm:$0xff]
  %v22 = vld [vmem:[%s1 + $0x10] sm:$0xff]
  %v23 = vld [vmem:[%s1 + $0x18] sm:$0xff]
  %v24 = vld [vmem:[%s0] sm:$0xff]
  %v25 = vld [vmem:[%s0 + $0x8] sm:$0xff]
  %v26 = vld [vmem:[%s0 + $0x10] sm:$0xff]
  %v27 = vld [vmem:[%s0 + $0x18] sm:$0xff]
  %v28 = vld [vmem:[%s0 + $0x20] sm:$0xff]
  %v29 = vld [vmem:[%s0 + $0x28] sm:$0xff]
  %v30 = vld [vmem:[%s0 + $0x30] sm:$0xff]
  %v31 = vld [vmem:[%s0 + $0x38] sm:$0xff]
  %v32 = vld [vmem:[%s0 + $0x40] sm:$0xff]
  %v33 = vld [vmem:[%s0 + $0x48] sm:$0xff]
  %v34 = vld [vmem:[%s0 + $0x50] sm:$0xff]
  %v35 = vld [vmem:[%s0 + $0x58] sm:$0xff]
  %v36 = vld [vmem:[%s0 + $0x60] sm:$0xff]
  %v37 = vld [vmem:[%s0 + $0x68] sm:$0xff]
  %v38 = vld [vmem:[%s0 + $0x70] sm:$0xff]
  %v39 = vld [vmem:[%s0 + $0x78] sm:$0xff]
  %v40 = vld [vmem:[%s2] sm:$0xff]
  %v41 = vld [vmem:[%s2 + $0x8] sm:$0xff]
  %v42 = vld [vmem:[%s2 + $0x10] sm:$0xff]
  %v43 = vld [vmem:[%s2 + $0x18] sm:$0xff]
  %45 = vset.pattern.permute.xlu0 0
  %46 = vperm.xlu0 %45, %v40
  %v47 = vpop.permute.xlu0 %46
  %50 = vset.pattern.permute.xlu0 0
  %51 = vperm.xlu0 %50, %v41
  %v52 = vpop.permute.xlu0 %51
  %55 = vset.pattern.permute.xlu0 0
  %56 = vperm.xlu0 %55, %v42
  %v57 = vpop.permute.xlu0 %56
  %60 = vset.pattern.permute.xlu0 0
  %61 = vperm.xlu0 %60, %v43
  %v62 = vpop.permute.xlu0 %61
  %vm64 = vcmask 130048
  %v66 = vsel %vm64, %v20, 0
  %v69 = vsel %vm64, %v21, 0
  %v72 = vsel %vm64, %v22, 0
  %v75 = vsel %vm64, %v23, 0
  %v78 = vsel %vm64, %v24, 0
  %v81 = vsel %vm64, %v25, 0
  %v84 = vsel %vm64, %v26, 0
  %v87 = vsel %vm64, %v27, 0
  %v90 = vsel %vm64, %v28, 0
  %v93 = vsel %vm64, %v29, 0
  %v96 = vsel %vm64, %v30, 0
  %v99 = vsel %vm64, %v31, 0
  %v102 = vsel %vm64, %v32, 0
  %v105 = vsel %vm64, %v33, 0
  %v108 = vsel %vm64, %v34, 0
  %v111 = vsel %vm64, %v35, 0
  %v114 = vsel %vm64, %v36, 0
  %v117 = vsel %vm64, %v37, 0
  %v120 = vsel %vm64, %v38, 0
  %v123 = vsel %vm64, %v39, 0
  %125 = vmatprep.subr.mxu0 0.0
  %126 = vmatpush1.xpose.msra.mxu0 %v78
  %127 = vmatprep.subr.mxu0 0.0
  %128 = vmatpush1.xpose.msra.mxu0 %v81
  %129 = vmatprep.subr.mxu0 0.0
  %130 = vmatpush1.xpose.msra.mxu0 %v84
  %131 = vmatprep.subr.mxu0 0.0
  %132 = vmatpush1.xpose.msra.mxu0 %v87
  %133 = vmatprep.subr.mxu0 0.0
  %134 = vmatpush1.xpose.msra.mxu0 %v90
  %135 = vmatprep.subr.mxu0 0.0
  %136 = vmatpush1.xpose.msra.mxu0 %v93
  %137 = vmatprep.subr.mxu0 0.0
  %138 = vmatpush1.xpose.msra.mxu0 %v96
  %139 = vmatprep.subr.mxu0 0.0
  %140 = vmatpush1.xpose.msra.mxu0 %v99
  %141 = vmatprep.subr.mxu0 0.0
  %142 = vmatpush1.xpose.msra.mxu0 %v102
  %143 = vmatprep.subr.mxu0 0.0
  %144 = vmatpush1.xpose.msra.mxu0 %v105
  %145 = vmatprep.subr.mxu0 0.0
  %146 = vmatpush1.xpose.msra.mxu0 %v108
  %147 = vmatprep.subr.mxu0 0.0
  %148 = vmatpush1.xpose.msra.mxu0 %v111
  %149 = vmatprep.subr.mxu0 0.0
  %150 = vmatpush1.xpose.msra.mxu0 %v114
  %151 = vmatprep.subr.mxu0 0.0
  %152 = vmatpush1.xpose.msra.mxu0 %v117
  %153 = vmatprep.subr.mxu0 0.0
  %154 = vmatpush1.xpose.msra.mxu0 %v120
  %155 = vmatprep.subr.mxu0 0.0
  %156 = vmatpush1.xpose.msra.mxu0 %v123
  %157 = vmatprep.subr.mxu0 0.0
  %158 = vmatpush1.xpose.msra.mxu0 0.0
  %159 = vmatprep.subr.mxu0 0.0
  %160 = vmatpush1.xpose.msra.mxu0 0.0
  %161 = vmatprep.subr.mxu0 0.0
  %162 = vmatpush1.xpose.msra.mxu0 0.0
  %163 = vmatprep.subr.mxu0 0.0
  %164 = vmatpush1.xpose.msra.mxu0 0.0
  %165 = vmatprep.subr.mxu0 0.0
  %166 = vmatpush1.xpose.msra.mxu0 0.0
  %167 = vmatprep.subr.mxu0 0.0
  %168 = vmatpush1.xpose.msra.mxu0 0.0
  %169 = vmatprep.subr.mxu0 0.0
  %170 = vmatpush1.xpose.msra.mxu0 0.0
  %171 = vmatprep.subr.mxu0 0.0
  %172 = vmatpush1.xpose.msra.mxu0 0.0
  %173 = vmatprep.subr.mxu0 0.0
  %174 = vmatpush1.xpose.msra.mxu0 0.0
  %175 = vmatprep.subr.mxu0 0.0
  %176 = vmatpush1.xpose.msra.mxu0 0.0
  %177 = vmatprep.subr.mxu0 0.0
  %178 = vmatpush1.xpose.msra.mxu0 0.0
  %179 = vmatprep.subr.mxu0 0.0
  %180 = vmatpush1.xpose.msra.mxu0 0.0
  %181 = vmatprep.subr.mxu0 0.0
  %182 = vmatpush1.xpose.msra.mxu0 0.0
  %183 = vmatprep.subr.mxu0 0.0
  %184 = vmatpush1.xpose.msra.mxu0 0.0
  %185 = vmatprep.subr.mxu0 0.0
  %186 = vmatpush1.xpose.msra.mxu0 0.0
  %187 = vmatprep.subr.mxu0 0.0
  %188 = vmatpush1.xpose.msra.mxu0 0.0
  %189 = vmatprep.mubr.f32.mxu0 0.0
  %190 = vmatmul.mubr.f32.gmra.mrb[0].mxu0 %v66
  %v191 = vpop.f32.mrb[0].mxu0
  %v192 = vadd.f32 %v47, %v191
  %v193 = vpop.f32.mrb[0].mxu0
  %194 = vmatprep.mubr.f32.mxu0 0.0
  %195 = vmatmul.mubr.f32.gmra.mrb[0].mxu0 %v69
  %v196 = vpop.f32.mrb[0].mxu0
  %v197 = vadd.f32 %v52, %v196
  %v198 = vpop.f32.mrb[0].mxu0
  %199 = vmatprep.mubr.f32.mxu0 0.0
  %200 = vmatmul.mubr.f32.gmra.mrb[0].mxu0 %v72
  %v201 = vpop.f32.mrb[0].mxu0
  %v202 = vadd.f32 %v57, %v201
  %v203 = vpop.f32.mrb[0].mxu0
  %204 = vmatprep.mubr.f32.mxu0 0.0
  %205 = vmatmul.mubr.f32.gmra.mrb[0].mxu0 %v75
  %v206 = vpop.f32.mrb[0].mxu0
  %v207 = vadd.f32 %v62, %v206
  %v208 = vpop.f32.mrb[0].mxu0
  %209 = vdwg.mxu0
  %v210 = vmax.f32 %v192, 0.0
  %v211 = vmax.f32 %v197, 0.0
  %v212 = vmax.f32 %v202, 0.0
  %v213 = vmax.f32 %v207, 0.0
  %v214 = vld [vmem:[%s3] sm:$0xff]
  %v215 = vld [vmem:[%s4] sm:$0xff]
  %217 = vset.pattern.permute.xlu0 0
  %218 = vperm.xlu0 %217, %v215
  %v219 = vpop.permute.xlu0 %218
  %vm221 = vcmask 261120
  %v223 = vsel %vm221, %v214, 0
  %225 = vmatprep.subr.mxu0 0.0
  %226 = vmatpush1.msra.mxu0 %v210
  %227 = vmatprep.subr.mxu0 0.0
  %228 = vmatpush1.msra.mxu0 %v211
  %229 = vmatprep.subr.mxu0 0.0
  %230 = vmatpush1.msra.mxu0 %v212
  %231 = vmatprep.subr.mxu0 0.0
  %232 = vmatpush1.msra.mxu0 %v213
  %233 = vmatprep.subr.mxu0 0.0
  %234 = vmatpush1.msra.mxu0 0.0
  %235 = vmatprep.subr.mxu0 0.0
  %236 = vmatpush1.msra.mxu0 0.0
  %237 = vmatprep.subr.mxu0 0.0
  %238 = vmatpush1.msra.mxu0 0.0
  %239 = vmatprep.subr.mxu0 0.0
  %240 = vmatpush1.msra.mxu0 0.0
  %241 = vmatprep.subr.mxu0 0.0
  %242 = vmatpush1.msra.mxu0 0.0
  %243 = vmatprep.subr.mxu0 0.0
  %244 = vmatpush1.msra.mxu0 0.0
  %245 = vmatprep.subr.mxu0 0.0
  %246 = vmatpush1.msra.mxu0 0.0
  %247 = vmatprep.subr.mxu0 0.0
  %248 = vmatpush1.msra.mxu0 0.0
  %249 = vmatprep.subr.mxu0 0.0
  %250 = vmatpush1.msra.mxu0 0.0
  %251 = vmatprep.subr.mxu0 0.0
  %252 = vmatpush1.msra.mxu0 0.0
  %253 = vmatprep.subr.mxu0 0.0
  %254 = vmatpush1.msra.mxu0 0.0
  %255 = vmatprep.subr.mxu0 0.0
  %256 = vmatpush1.msra.mxu0 0.0
  %257 = vmatprep.subr.mxu0 0.0
  %258 = vmatpush1.msra.mxu0 0.0
  %259 = vmatprep.subr.mxu0 0.0
  %260 = vmatpush1.msra.mxu0 0.0
  %261 = vmatprep.subr.mxu0 0.0
  %262 = vmatpush1.msra.mxu0 0.0
  %263 = vmatprep.subr.mxu0 0.0
  %264 = vmatpush1.msra.mxu0 0.0
  %265 = vmatprep.subr.mxu0 0.0
  %266 = vmatpush1.msra.mxu0 0.0
  %267 = vmatprep.subr.mxu0 0.0
  %268 = vmatpush1.msra.mxu0 0.0
  %269 = vmatprep.subr.mxu0 0.0
  %270 = vmatpush1.msra.mxu0 0.0
  %271 = vmatprep.subr.mxu0 0.0
  %272 = vmatpush1.msra.mxu0 0.0
  %273 = vmatprep.subr.mxu0 0.0
  %274 = vmatpush1.msra.mxu0 0.0
  %275 = vmatprep.subr.mxu0 0.0
  %276 = vmatpush1.msra.mxu0 0.0
  %277 = vmatprep.subr.mxu0 0.0
  %278 = vmatpush1.msra.mxu0 0.0
  %279 = vmatprep.subr.mxu0 0.0
  %280 = vmatpush1.msra.mxu0 0.0
  %281 = vmatprep.subr.mxu0 0.0
  %282 = vmatpush1.msra.mxu0 0.0
  %283 = vmatprep.subr.mxu0 0.0
  %284 = vmatpush1.msra.mxu0 0.0
  %285 = vmatprep.subr.mxu0 0.0
  %286 = vmatpush1.msra.mxu0 0.0
  %287 = vmatprep.subr.mxu0 0.0
  %288 = vmatpush1.msra.mxu0 0.0
  %289 = vmatprep.mubr.f32.mxu0 0.0
  %290 = vmatmul.mubr.f32.gmra.mrb[0].mxu0 %v223
  %v291 = vpop.f32.mrb[0].mxu0
  %v292 = vadd.f32 %v219, %v291
  %v293 = vpop.f32.mrb[0].mxu0
  %294 = vdwg.mxu0
  %295 = vst [vmem:[%s5] sm:$0xff] %v292
  // Predicated region
  $region22: #{numeric_only_gene_forward.1} parent=0 // pred_check
    _
  $region23: #{numeric_only_gene_forward.1} parent=0 // pred_check_branch
    %297 = sbr.rel (0) target = $region25
  $region24: #{numeric_only_gene_forward.1} parent=0 // pred_region
    _
  $region25: #{numeric_only_gene_forward.1} parent=0 // pred_fallthru
    _
  // Predicated region
  $region26: #{numeric_only_gene_forward.1} parent=0 // pred_check
    _
  $region27: #{numeric_only_gene_forward.1} parent=0 // pred_check_branch
    %299 = sbr.rel (0) target = $region29
  $region28: #{numeric_only_gene_forward.1} parent=0 // pred_region
    _
  $region29: #{numeric_only_gene_forward.1} parent=0 // pred_fallthru
    _

</llo_original>
